<compile_context>
chip_gen: v7x
topology: tpu7x:2x2x1
jax: 0.10.0
libtpu: 0.0.40
codegen_flags: <defaults>
</compile_context>

<pallas_src>
import functools

import jax
import jax.numpy as jnp
from jax.experimental import pallas as pl
from jax.experimental.pallas import tpu as pltpu

BN_EPS = 1e-5


def _round_up(x, m):
    return ((x + m - 1) // m) * m


def _pick_tile(dim, candidates):
    for c in candidates:
        if c <= dim and dim % c == 0:
            return c
    return dim  # dim is always a multiple of 128 here, so 128 always matches


def _fc_kernel(x_ref, w_ref, b_ref, g_ref, be_ref, o_ref, acc_ref, *,
               n_real, with_bn):
    """Grid = (D_out tiles [parallel], K tiles [arbitrary, last]).

    x_ref  : (N_pad, tk)  batch resident
    w_ref  : (tn, tk)     weight tile in native PyTorch (D_out, D_in) layout
    b/g/be : (1, tn)      bias / gamma / beta tiles
    o_ref  : (N_pad, tn)  resident across the K axis
    acc_ref: (N_pad, tn)  f32 accumulator scratch
    """
    k = pl.program_id(1)

    @pl.when(k == 0)
    def _():
        acc_ref[...] = jnp.zeros_like(acc_ref)

    # Contract the D_in dims of both tiles: (N, tk) x (tn, tk) -> (N, tn).
    # Keeps the weight in its native layout (no HBM transpose per call).
    acc_ref[...] += jax.lax.dot_general(
        x_ref[...], w_ref[...],
        dimension_numbers=(((1,), (1,)), ((), ())),
        preferred_element_type=jnp.float32)

    @pl.when(k == pl.num_programs(1) - 1)
    def _():
        y = acc_ref[...] + b_ref[...]
        if with_bn:
            n_pad = y.shape[0]
            if n_pad == n_real:
                mean = jnp.mean(y, axis=0, keepdims=True)
                centered = y - mean
                var = jnp.mean(centered * centered, axis=0, keepdims=True)
            else:
                # Batch axis was padded: mask padded rows out of the stats.
                row = jax.lax.broadcasted_iota(jnp.int32, y.shape, 0)
                mask = (row < n_real).astype(jnp.float32)
                inv_n = 1.0 / float(n_real)
                mean = jnp.sum(y * mask, axis=0, keepdims=True) * inv_n
                centered = y - mean
                var = jnp.sum(centered * centered * mask, axis=0,
                              keepdims=True) * inv_n
            # Fold gamma into the inverse std (saves one (N, tn) multiply).
            scale = jax.lax.rsqrt(var + BN_EPS) * g_ref[...]
            y = centered * scale + be_ref[...]
        o_ref[...] = jnp.maximum(y, 0.0).astype(o_ref.dtype)


@functools.partial(jax.jit, static_argnames=("with_bn",))
def fully_connected(x, weight, bias, gamma=None, beta=None, *, with_bn=True):
    """Forward pass of Fully_connected.

    x:      (N, D_in) float32
    weight: (D_out, D_in)  -- PyTorch nn.Linear layout (used as-is, no transpose)
    bias:   (D_out,)
    gamma, beta: (D_out,)  -- BatchNorm1d affine params (if with_bn)
    returns (N, D_out) float32
    """
    n, d_in = x.shape
    d_out, _ = weight.shape

    # Pad to TPU-friendly shapes: last dim multiple of 128 lanes, N multiple of 8.
    n_pad = _round_up(n, 8)
    d_in_pad = _round_up(d_in, 128)
    d_out_pad = _round_up(d_out, 128)

    if (n_pad, d_in_pad) != (n, d_in):
        x = jnp.pad(x, ((0, n_pad - n), (0, d_in_pad - d_in)))
    if (d_out_pad, d_in_pad) != (d_out, d_in):
        weight = jnp.pad(weight, ((0, d_out_pad - d_out), (0, d_in_pad - d_in)))

    def pad_vec(v):
        if d_out_pad != d_out:
            v = jnp.pad(v, (0, d_out_pad - d_out))
        return v.reshape(1, d_out_pad).astype(jnp.float32)

    b2 = pad_vec(bias)
    if with_bn:
        g2 = pad_vec(gamma)
        be2 = pad_vec(beta)
    else:
        g2 = jnp.ones((1, d_out_pad), jnp.float32)
        be2 = jnp.zeros((1, d_out_pad), jnp.float32)

    # Lane-dense D_out tiles (multiple of 128); K tiles up to 512.
    tn = _pick_tile(d_out_pad, (256, 128))
    tk = _pick_tile(d_in_pad, (512, 256, 128))
    grid = (d_out_pad // tn, d_in_pad // tk)

    kernel = functools.partial(_fc_kernel, n_real=n, with_bn=with_bn)

    # VMEM budget for the chosen tiles: double-buffered inputs + accumulator
    # scratch + double-buffered output, with 2x headroom, capped at v7x's 64 MiB.
    tile_bytes = 4 * (2 * (n_pad * tk + tn * tk + 3 * tn)
                      + n_pad * tn          # accumulator scratch
                      + 2 * n_pad * tn)     # output double-buffer
    vmem_limit = min(max(2 * tile_bytes, 16 * 1024 * 1024), 64 * 1024 * 1024)

    out_padded = pl.pallas_call(
        kernel,
        out_shape=jax.ShapeDtypeStruct((n_pad, d_out_pad), jnp.float32),
        grid_spec=pltpu.PrefetchScalarGridSpec(
            num_scalar_prefetch=0,
            grid=grid,
            in_specs=[
                pl.BlockSpec((n_pad, tk), lambda j, k: (0, k)),   # x
                pl.BlockSpec((tn, tk), lambda j, k: (j, k)),      # weight
                pl.BlockSpec((1, tn), lambda j, k: (0, j)),       # bias
                pl.BlockSpec((1, tn), lambda j, k: (0, j)),       # gamma
                pl.BlockSpec((1, tn), lambda j, k: (0, j)),       # beta
            ],
            out_specs=pl.BlockSpec((n_pad, tn), lambda j, k: (0, j)),
            scratch_shapes=[pltpu.VMEM((n_pad, tn), jnp.float32)],
        ),
        compiler_params=pltpu.CompilerParams(
            dimension_semantics=("parallel", "arbitrary"),
            vmem_limit_bytes=vmem_limit,
        ),
        cost_estimate=pl.CostEstimate(
            flops=2 * n * d_in * d_out,
            transcendentals=0,
            bytes_accessed=4 * (n * d_in + d_out * d_in + n * d_out + 3 * d_out),
        ),
    )(x, weight, b2, g2, be2)

    if (n_pad, d_out_pad) != (n, d_out):
        out_padded = out_padded[:n, :d_out]
    return out_padded


def _reference(x, weight, bias, gamma, beta, with_bn=True):
    y = x @ weight.T + bias
    if with_bn:
        mean = y.mean(axis=0, keepdims=True)
        var = ((y - mean) ** 2).mean(axis=0, keepdims=True)
        y = (y - mean) / jnp.sqrt(var + BN_EPS) * gamma + beta
    return jnp.maximum(y, 0.0)


if __name__ == "__main__":
    key = jax.random.PRNGKey(0)
    k_x, k_w, k_b = jax.random.split(key, 3)

    batch = 8
    inp_dim = 32
    out_dim = 64

    x = jax.random.normal(k_x, (batch, inp_dim), dtype=jnp.float32)

    # Deterministic parameter init (PyTorch Linear-style uniform bound).
    bound = 1.0 / (inp_dim ** 0.5)
    weight = jax.random.uniform(
        k_w, (out_dim, inp_dim), minval=-bound, maxval=bound, dtype=jnp.float32)
    bias = jax.random.uniform(
        k_b, (out_dim,), minval=-bound, maxval=bound, dtype=jnp.float32)
    # BatchNorm1d default init: gamma=1, beta=0.
    gamma = jnp.ones((out_dim,), dtype=jnp.float32)
    beta = jnp.zeros((out_dim,), dtype=jnp.float32)

    out = fully_connected(x, weight, bias, gamma, beta, with_bn=True)
    out = jax.block_until_ready(out)

    ref = _reference(x, weight, bias, gamma, beta, with_bn=True)
    assert out.shape == (batch, out_dim)
    assert jnp.allclose(out, ref, atol=1e-4, rtol=1e-4), "mismatch vs reference"

    # Also exercise the with_bn=False path once.
    out_nobn = jax.block_until_ready(
        fully_connected(x, weight, bias, with_bn=False))
    ref_nobn = _reference(x, weight, bias, gamma, beta, with_bn=False)
    assert jnp.allclose(out_nobn, ref_nobn, atol=1e-4, rtol=1e-4)

    # TODO(synk): BatchNorm1d running_mean/running_var training-side updates are
    # not emitted (only the normalized forward output, matching module output).

    print("KERNEL_OK")
</pallas_src>

<mosaic_0001>
module attributes {stable_mosaic.version = 11 : i64} {
  func.func @_fc_kernel(%arg0: i32, %arg1: i32, %arg2: memref<8x128xf32, #tpu.memory_space<vmem>>, %arg3: memref<128x128xf32, #tpu.memory_space<vmem>>, %arg4: memref<1x128xf32, #tpu.memory_space<vmem>>, %arg5: memref<1x128xf32, #tpu.memory_space<vmem>>, %arg6: memref<1x128xf32, #tpu.memory_space<vmem>>, %arg7: memref<8x128xf32, #tpu.memory_space<vmem>>, %arg8: memref<8x128xf32, #tpu.memory_space<vmem>>) attributes {dimension_semantics = [#tpu.dimension_semantics<parallel>, #tpu.dimension_semantics<arbitrary>], iteration_bounds = array<i64: 1, 1>, scalar_prefetch = 0 : i64, scratch_operands = 1 : i64, tpu.core_type = #tpu.core_type<tc>, window_params = [{transform_indices = @transform_0, window_bounds = array<i64: 8, 128>}, {transform_indices = @transform_1, window_bounds = array<i64: 128, 128>}, {transform_indices = @transform_2, window_bounds = array<i64: 1, 128>}, {transform_indices = @transform_3, window_bounds = array<i64: 1, 128>}, {transform_indices = @transform_4, window_bounds = array<i64: 1, 128>}, {transform_indices = @transform_5, window_bounds = array<i64: 8, 128>}]} {
    %c0_i32 = arith.constant 0 : i32
    %0 = arith.cmpi eq, %arg1, %c0_i32 : i32
    %1 = arith.extui %0 : i1 to i32
    %c0_i32_0 = arith.constant 0 : i32
    %2 = arith.cmpi ne, %1, %c0_i32_0 : i32
    scf.if %2 {
      %cst_10 = arith.constant 0.000000e+00 : f32
      %12 = vector.broadcast %cst_10 : f32 to vector<8x128xf32>
      %c0_11 = arith.constant 0 : index
      %c0_12 = arith.constant 0 : index
      %13 = vector.load %arg8[%c0_11, %c0_12] : memref<8x128xf32, #tpu.memory_space<vmem>>, vector<8x128xf32>
      tpu.vector_store %arg8[%c0_11, %c0_12], %12 {strides = array<i32>} : memref<8x128xf32, #tpu.memory_space<vmem>>, vector<8x128xf32>,
    } else {
    }
    %c0 = arith.constant 0 : index
    %c0_1 = arith.constant 0 : index
    %3 = vector.load %arg8[%c0, %c0_1] : memref<8x128xf32, #tpu.memory_space<vmem>>, vector<8x128xf32>
    %c0_2 = arith.constant 0 : index
    %c0_3 = arith.constant 0 : index
    %4 = vector.load %arg2[%c0_2, %c0_3] : memref<8x128xf32, #tpu.memory_space<vmem>>, vector<8x128xf32>
    %c0_4 = arith.constant 0 : index
    %c0_5 = arith.constant 0 : index
    %5 = vector.load %arg3[%c0_4, %c0_5] : memref<128x128xf32, #tpu.memory_space<vmem>>, vector<128x128xf32>
    %cst = arith.constant dense<0.000000e+00> : vector<8x128xf32>
    %6 = tpu.matmul %4, %5, %cst {dimension_numbers = #tpu.dot_dimension_numbers<[1], [1], [0], [0], [0, 0, 1, 0], [], []>} : vector<8x128xf32>, vector<128x128xf32>, vector<8x128xf32> -> vector<8x128xf32>
    %7 = arith.addf %3, %6 : vector<8x128xf32>
    %c0_6 = arith.constant 0 : index
    %c0_7 = arith.constant 0 : index
    %8 = vector.load %arg8[%c0_6, %c0_7] : memref<8x128xf32, #tpu.memory_space<vmem>>, vector<8x128xf32>
    tpu.vector_store %arg8[%c0_6, %c0_7], %7 {strides = array<i32>} : memref<8x128xf32, #tpu.memory_space<vmem>>, vector<8x128xf32>,
    %c0_i32_8 = arith.constant 0 : i32
    %9 = arith.cmpi eq, %arg1, %c0_i32_8 : i32
    %10 = arith.extui %9 : i1 to i32
    %c0_i32_9 = arith.constant 0 : i32
    %11 = arith.cmpi ne, %10, %c0_i32_9 : i32
    scf.if %11 {
      %c0_10 = arith.constant 0 : index
      %c0_11 = arith.constant 0 : index
      %12 = vector.load %arg8[%c0_10, %c0_11] : memref<8x128xf32, #tpu.memory_space<vmem>>, vector<8x128xf32>
      %c0_12 = arith.constant 0 : index
      %c0_13 = arith.constant 0 : index
      %13 = vector.load %arg4[%c0_12, %c0_13] : memref<1x128xf32, #tpu.memory_space<vmem>>, vector<1x128xf32>
      %14 = vector.broadcast %13 : vector<1x128xf32> to vector<8x128xf32>
      %15 = arith.addf %12, %14 : vector<8x128xf32>
      %cst_14 = arith.constant dense<0.000000e+00> : vector<128xf32>
      %16 = vector.multi_reduction <add>, %15, %cst_14 [0] : vector<8x128xf32> to vector<128xf32>
      %17 = vector.shape_cast %16 : vector<128xf32> to vector<1x128xf32>
      %cst_15 = arith.constant 8.000000e+00 : f32
      %18 = vector.broadcast %cst_15 : f32 to vector<1x128xf32>
      %19 = arith.divf %17, %18 : vector<1x128xf32>
      %20 = vector.broadcast %19 : vector<1x128xf32> to vector<8x128xf32>
      %21 = arith.subf %15, %20 : vector<8x128xf32>
      %22 = arith.mulf %21, %21 : vector<8x128xf32>
      %cst_16 = arith.constant dense<0.000000e+00> : vector<128xf32>
      %23 = vector.multi_reduction <add>, %22, %cst_16 [0] : vector<8x128xf32> to vector<128xf32>
      %24 = vector.shape_cast %23 : vector<128xf32> to vector<1x128xf32>
      %cst_17 = arith.constant 8.000000e+00 : f32
      %25 = vector.broadcast %cst_17 : f32 to vector<1x128xf32>
      %26 = arith.divf %24, %25 : vector<1x128xf32>
      %cst_18 = arith.constant 9.99999974E-6 : f32
      %27 = vector.broadcast %cst_18 : f32 to vector<1x128xf32>
      %28 = arith.addf %26, %27 : vector<1x128xf32>
      %29 = math.rsqrt %28 : vector<1x128xf32>
      %c0_19 = arith.constant 0 : index
      %c0_20 = arith.constant 0 : index
      %30 = vector.load %arg5[%c0_19, %c0_20] : memref<1x128xf32, #tpu.memory_space<vmem>>, vector<1x128xf32>
      %31 = arith.mulf %29, %30 : vector<1x128xf32>
      %32 = vector.broadcast %31 : vector<1x128xf32> to vector<8x128xf32>
      %33 = arith.mulf %21, %32 : vector<8x128xf32>
      %c0_21 = arith.constant 0 : index
      %c0_22 = arith.constant 0 : index
      %34 = vector.load %arg6[%c0_21, %c0_22] : memref<1x128xf32, #tpu.memory_space<vmem>>, vector<1x128xf32>
      %35 = vector.broadcast %34 : vector<1x128xf32> to vector<8x128xf32>
      %36 = arith.addf %33, %35 : vector<8x128xf32>
      %cst_23 = arith.constant 0.000000e+00 : f32
      %37 = vector.broadcast %cst_23 : f32 to vector<8x128xf32>
      %38 = arith.maximumf %36, %37 : vector<8x128xf32>
      %c0_24 = arith.constant 0 : index
      %c0_25 = arith.constant 0 : index
      %39 = vector.load %arg7[%c0_24, %c0_25] : memref<8x128xf32, #tpu.memory_space<vmem>>, vector<8x128xf32>
      tpu.vector_store %arg7[%c0_24, %c0_25], %38 {strides = array<i32>} : memref<8x128xf32, #tpu.memory_space<vmem>>, vector<8x128xf32>,
    } else {
    }
    return
  }
  func.func @transform_0(%arg0: i32, %arg1: i32) -> (i32, i32) {
    %c0_i32 = arith.constant 0 : i32
    %c0_i32_0 = arith.constant 0 : i32
    return %c0_i32, %arg1 : i32, i32
  }
  func.func @transform_1(%arg0: i32, %arg1: i32) -> (i32, i32) {
    %c0_i32 = arith.constant 0 : i32
    return %arg0, %arg1 : i32, i32
  }
  func.func @transform_2(%arg0: i32, %arg1: i32) -> (i32, i32) {
    %c0_i32 = arith.constant 0 : i32
    %c0_i32_0 = arith.constant 0 : i32
    return %c0_i32, %arg0 : i32, i32
  }
  func.func @transform_3(%arg0: i32, %arg1: i32) -> (i32, i32) {
    %c0_i32 = arith.constant 0 : i32
    %c0_i32_0 = arith.constant 0 : i32
    return %c0_i32, %arg0 : i32, i32
  }
  func.func @transform_4(%arg0: i32, %arg1: i32) -> (i32, i32) {
    %c0_i32 = arith.constant 0 : i32
    %c0_i32_0 = arith.constant 0 : i32
    return %c0_i32, %arg0 : i32, i32
  }
  func.func @transform_5(%arg0: i32, %arg1: i32) -> (i32, i32) {
    %c0_i32 = arith.constant 0 : i32
    %c0_i32_0 = arith.constant 0 : i32
    return %c0_i32, %arg0 : i32, i32
  }
}

</mosaic_0001>

<llo_original>
// kernel: fully_connected.1
$region0: #{fully_connected.1}
  #allocation0 [shape = 'u32[]', space=smem, size = 0x4, offset = 0x4, fixed_abs, tag = 'smem constant byte address 0x4 - core index']
  #allocation1 [shape = 'u32[144,128]{1,0:T(1,128)}', space=vmem, size = 0x12000, scoped, tag = 'internal scratch']
  #allocation2 [shape = 'f32[8,128]{1,0:T(8,128)}', space=vmem, size = 0x1000, scoped, tag = 'scratch operand']
  %s0 = inlined_call_operand.vmem [shape: f32[8,128], index: 0, kind: input, shape index: {}]
  %s1 = inlined_call_operand.vmem [shape: f32[128,128], index: 1, kind: input, shape index: {}]
  %s2 = inlined_call_operand.vmem [shape: f32[1,128], index: 2, kind: input, shape index: {}]
  %s3 = inlined_call_operand.vmem [shape: f32[1,128], index: 3, kind: input, shape index: {}]
  %s4 = inlined_call_operand.vmem [shape: f32[1,128], index: 4, kind: input, shape index: {}]
  %s5 = inlined_call_operand.hbm [shape: f32[8,128], index: 5, kind: output, shape index: {}]
  %s6 = sld [smem:[#allocation0]]
  $region38: #{fully_connected.1} parent=0
    _
  %s8 = ssub.s32 1, %s6
  %s9 = scalar_select 0, %s8, %s6
  $region1: #{fully_connected.1} parent=0
    #allocation3 [shape = 'u8[4096]{0}', space=vmem, size = 0x1000, scoped, tag = 'output window, operand 0, single buffered']
    #allocation4 [shape = 's32[1]{0}', space=sflag, size = 0x4, scoped, tag = 'scoped memory for fully_connected.1']
    %10 = vsyncpa [#allocation4], 0
    // Predicated region
    $region2: #{fully_connected.1} parent=1 // pred_check
      _
    $region3: #{fully_connected.1} parent=1 // pred_check_branch
      %12 = sbr.rel (0) target = $region5
    $region4: #{fully_connected.1} parent=1 // pred_region
      _
    $region5: #{fully_connected.1} parent=1 // pred_fallthru
      _
    // Predicated region
    $region6: #{fully_connected.1} parent=1 // pred_check
      _
    $region7: #{fully_connected.1} parent=1 // pred_check_branch
      %14 = sbr.rel (0) target = $region9
    $region8: #{fully_connected.1} parent=1 // pred_region
      _
    $region9: #{fully_connected.1} parent=1 // pred_fallthru
      _
    // Predicated region
    $region10: #{fully_connected.1} parent=1 // pred_check
      _
    $region11: #{fully_connected.1} parent=1 // pred_check_branch
      %16 = sbr.rel (0) target = $region13
    $region12: #{fully_connected.1} parent=1 // pred_region
      _
    $region13: #{fully_connected.1} parent=1 // pred_fallthru
      _
    // Predicated region
    $region14: #{fully_connected.1} parent=1 // pred_check
      _
    $region15: #{fully_connected.1} parent=1 // pred_check_branch
      %18 = sbr.rel (0) target = $region17
    $region16: #{fully_connected.1} parent=1 // pred_region
      _
    $region17: #{fully_connected.1} parent=1 // pred_fallthru
      _
    // Predicated region
    $region18: #{fully_connected.1} parent=1 // pred_check
      _
    $region19: #{fully_connected.1} parent=1 // pred_check_branch
      %20 = sbr.rel (0) target = $region21
    $region20: #{fully_connected.1} parent=1 // pred_region
      _
    $region21: #{fully_connected.1} parent=1 // pred_fallthru
      _
    %p21 = scmp.eq.s32.totalorder 0, 0
    // Predicated region
    $region22: #{fully_connected.1} parent=1 // pred_check
      %p22 = pneg %p21
    $region23: #{fully_connected.1} parent=1 // pred_check_branch
      %24 = sbr.rel (%p22) target = $region25
    $region24: #{fully_connected.1} parent=1 // pred_region
      %25 = vst [vmem:[#allocation2] sm:$0xff] 0.0
    $region25: #{fully_connected.1} parent=1 // pred_fallthru
      _
    %v26 = vld [vmem:[#allocation2] sm:$0xff]
    %v27 = vld [vmem:[%s0] sm:$0xff]
    %v28 = vld [vmem:[%s1] sm:$0xff]
    %v29 = vld [vmem:[%s1 + $0x8] sm:$0xff]
    %v30 = vld [vmem:[%s1 + $0x10] sm:$0xff]
    %v31 = vld [vmem:[%s1 + $0x18] sm:$0xff]
    %v32 = vld [vmem:[%s1 + $0x20] sm:$0xff]
    %v33 = vld [vmem:[%s1 + $0x28] sm:$0xff]
    %v34 = vld [vmem:[%s1 + $0x30] sm:$0xff]
    %v35 = vld [vmem:[%s1 + $0x38] sm:$0xff]
    %v36 = vld [vmem:[%s1 + $0x40] sm:$0xff]
    %v37 = vld [vmem:[%s1 + $0x48] sm:$0xff]
    %v38 = vld [vmem:[%s1 + $0x50] sm:$0xff]
    %v39 = vld [vmem:[%s1 + $0x58] sm:$0xff]
    %v40 = vld [vmem:[%s1 + $0x60] sm:$0xff]
    %v41 = vld [vmem:[%s1 + $0x68] sm:$0xff]
    %v42 = vld [vmem:[%s1 + $0x70] sm:$0xff]
    %v43 = vld [vmem:[%s1 + $0x78] sm:$0xff]
    %44 = vmatprep.subr.mxu0 0.0
    %45 = vmatpush1.xpose.msra.mxu0 %v28
    %46 = vmatprep.subr.mxu0 0.0
    %47 = vmatpush1.xpose.msra.mxu0 %v29
    %48 = vmatprep.subr.mxu0 0.0
    %49 = vmatpush1.xpose.msra.mxu0 %v30
    %50 = vmatprep.subr.mxu0 0.0
    %51 = vmatpush1.xpose.msra.mxu0 %v31
    %52 = vmatprep.subr.mxu0 0.0
    %53 = vmatpush1.xpose.msra.mxu0 %v32
    %54 = vmatprep.subr.mxu0 0.0
    %55 = vmatpush1.xpose.msra.mxu0 %v33
    %56 = vmatprep.subr.mxu0 0.0
    %57 = vmatpush1.xpose.msra.mxu0 %v34
    %58 = vmatprep.subr.mxu0 0.0
    %59 = vmatpush1.xpose.msra.mxu0 %v35
    %60 = vmatprep.subr.mxu0 0.0
    %61 = vmatpush1.xpose.msra.mxu0 %v36
    %62 = vmatprep.subr.mxu0 0.0
    %63 = vmatpush1.xpose.msra.mxu0 %v37
    %64 = vmatprep.subr.mxu0 0.0
    %65 = vmatpush1.xpose.msra.mxu0 %v38
    %66 = vmatprep.subr.mxu0 0.0
    %67 = vmatpush1.xpose.msra.mxu0 %v39
    %68 = vmatprep.subr.mxu0 0.0
    %69 = vmatpush1.xpose.msra.mxu0 %v40
    %70 = vmatprep.subr.mxu0 0.0
    %71 = vmatpush1.xpose.msra.mxu0 %v41
    %72 = vmatprep.subr.mxu0 0.0
    %73 = vmatpush1.xpose.msra.mxu0 %v42
    %74 = vmatprep.subr.mxu0 0.0
    %75 = vmatpush1.xpose.msra.mxu0 %v43
    %76 = vmatprep.subr.mxu0 0.0
    %77 = vmatpush1.xpose.msra.mxu0 0.0
    %78 = vmatprep.subr.mxu0 0.0
    %79 = vmatpush1.xpose.msra.mxu0 0.0
    %80 = vmatprep.subr.mxu0 0.0
    %81 = vmatpush1.xpose.msra.mxu0 0.0
    %82 = vmatprep.subr.mxu0 0.0
    %83 = vmatpush1.xpose.msra.mxu0 0.0
    %84 = vmatprep.subr.mxu0 0.0
    %85 = vmatpush1.xpose.msra.mxu0 0.0
    %86 = vmatprep.subr.mxu0 0.0
    %87 = vmatpush1.xpose.msra.mxu0 0.0
    %88 = vmatprep.subr.mxu0 0.0
    %89 = vmatpush1.xpose.msra.mxu0 0.0
    %90 = vmatprep.subr.mxu0 0.0
    %91 = vmatpush1.xpose.msra.mxu0 0.0
    %92 = vmatprep.subr.mxu0 0.0
    %93 = vmatpush1.xpose.msra.mxu0 0.0
    %94 = vmatprep.subr.mxu0 0.0
    %95 = vmatpush1.xpose.msra.mxu0 0.0
    %96 = vmatprep.subr.mxu0 0.0
    %97 = vmatpush1.xpose.msra.mxu0 0.0
    %98 = vmatprep.subr.mxu0 0.0
    %99 = vmatpush1.xpose.msra.mxu0 0.0
    %100 = vmatprep.subr.mxu0 0.0
    %101 = vmatpush1.xpose.msra.mxu0 0.0
    %102 = vmatprep.subr.mxu0 0.0
    %103 = vmatpush1.xpose.msra.mxu0 0.0
    %104 = vmatprep.subr.mxu0 0.0
    %105 = vmatpush1.xpose.msra.mxu0 0.0
    %106 = vmatprep.subr.mxu0 0.0
    %107 = vmatpush1.xpose.msra.mxu0 0.0
    %108 = vmatprep.mubr.f32.mxu0 0.0
    %109 = vmatmul.mubr.f32.gmra.mrb[0].mxu0 %v27
    %v110 = vpop.f32.mrb[0].mxu0
    %v111 = vadd.f32 0.0, %v110
    %v112 = vpop.f32.mrb[0].mxu0
    %113 = vdwg.mxu0
    %v114 = vadd.f32 %v26, %v111
    %115 = vst [vmem:[#allocation2] sm:$0xff] %v114
    // Predicated region
    $region26: #{fully_connected.1} parent=1 // pred_check
      %p116 = pneg %p21
    $region27: #{fully_connected.1} parent=1 // pred_check_branch
      %118 = sbr.rel (%p116) target = $region29
    $region28: #{fully_connected.1} parent=1 // pred_region
      %v119 = vld [vmem:[#allocation2] sm:$0xff]
      %v120 = vld [vmem:[%s2] sm:$0x1]
      %v122 = vlaneseq
      %v123 = vshrl.u32 %v122, 7
      %v124 = vsub.s32 0, %v123
      %v125 = vrot.slane %v120, %v124
      %v127 = vadd.f32 %v119, %v125
      %v128 = vrot.slane %v127, 4
      %v129 = vadd.f32 %v127, %v128
      %v130 = vrot.slane %v129, 2
      %v131 = vadd.f32 %v129, %v130
      %v132 = vrot.slane %v131, 1
      %v133 = vadd.f32 %v131, %v132
      %v134 = vrcp.pop 8.0
      %v135 = vmul.f32 %v133, %v134
      %v136 = vsub.f32 %v127, %v135
      %v137 = vmul.f32 %v136, %v136
      %v138 = vrot.slane %v137, 4
      %v139 = vadd.f32 %v137, %v138
      %v140 = vrot.slane %v139, 2
      %v141 = vadd.f32 %v139, %v140
      %v142 = vrot.slane %v141, 1
      %v143 = vadd.f32 %v141, %v142
      %v144 = vmul.f32 %v143, %v134
      %v145 = vadd.f32 %v144, 1e-05
      %v146 = vrsqrt.pop %v145
      %v147 = vld [vmem:[%s3] sm:$0x1]
      %v148 = vmul.f32 %v146, %v147
      %v149 = vlaneseq
      %v150 = vshrl.u32 %v149, 7
      %v151 = vsub.s32 0, %v150
      %v152 = vrot.slane %v148, %v151
      %v153 = vmul.f32 %v136, %v152
      %v154 = vld [vmem:[%s4] sm:$0x1]
      %v156 = vlaneseq
      %v157 = vshrl.u32 %v156, 7
      %v158 = vsub.s32 0, %v157
      %v159 = vrot.slane %v154, %v158
      %v161 = vadd.f32 %v153, %v159
      %v162 = vmax.f32 %v161, 0.0
      %163 = vst [vmem:[#allocation3] sm:$0xff] %v162
    $region29: #{fully_connected.1} parent=1 // pred_fallthru
      _
    // Predicated region
    $region30: #{fully_connected.1} parent=1 // pred_check
      _
    $region31: #{fully_connected.1} parent=1 // pred_check_branch
      %165 = sbr.rel (0) target = $region33
    $region32: #{fully_connected.1} parent=1 // pred_region
      %s167 = ssub.s32 128, 128
      %168 = vsyncadd [#allocation4], %s167
      %s170 = sshll.u32 [#allocation3], 4
      %s171 = int_to_ptr.vmem [resolvable:$true] %s170
      %173 = dma.vmem_to_hbm [thread:$0]  %s171, 128, %s5, [#allocation4]
    $region33: #{fully_connected.1} parent=1 // pred_fallthru
      _
    // Predicated region
    $region34: #{fully_connected.1} parent=1 // pred_check
      _
    $region35: #{fully_connected.1} parent=1 // pred_check_branch
      %175 = sbr.rel (0) target = $region37
    $region36: #{fully_connected.1} parent=1 // pred_region
      %176 = dma.done [#allocation4], 128
    $region37: #{fully_connected.1} parent=1 // pred_fallthru
      _
    %177 = vsyncpa [#allocation4], 1

</llo_original>
